<compile_context>
chip_gen: v7x
topology: tpu7x:2x2x1
jax: 0.10.0
libtpu: 0.0.40
codegen_flags: <defaults>
</compile_context>

<pallas_src>
import functools
import itertools

import numpy as np
import jax
import jax.numpy as jnp
from jax import lax
from jax.experimental import pallas as pl
from jax.experimental.pallas import tpu as pltpu


# ----------------------------------------------------------------------------
# Pallas kernel 1: tiled bf16 matmul, fused BN scale/bias (+ReLU), bf16 out
# ----------------------------------------------------------------------------
def _mm_kernel(x_ref, w_ref, s_ref, b_ref, o_ref, acc_ref, *, relu):
    @pl.when(pl.program_id(2) == 0)
    def _():
        acc_ref[...] = jnp.zeros_like(acc_ref)

    acc_ref[...] += jnp.dot(x_ref[...], w_ref[...],
                            preferred_element_type=jnp.float32)

    @pl.when(pl.program_id(2) == pl.num_programs(2) - 1)
    def _():
        y = acc_ref[...] * s_ref[...] + b_ref[...]
        if relu:
            y = jnp.maximum(y, 0.0)
        o_ref[...] = y.astype(o_ref.dtype)


def _round_up(x, m):
    return ((x + m - 1) // m) * m


def _pick_tile(dim, max_tile):
    """Prefer large tiles (MXU-wide); tolerate a little padding waste."""
    base = _round_up(dim, 128)
    if base <= max_tile:
        return base, base
    t = max_tile
    while t > 128:
        p = _round_up(dim, t)
        if p - base <= max(base // 12, 128):
            return t, p
        t -= 128
    return 128, base


@functools.partial(jax.jit, static_argnames=("relu",))
def matmul_bn_act(x, w, scale, bias, *, relu):
    """y = act((x @ w) * scale + bias); x:(M,K) w:(K,N) bf16 -> bf16."""
    M, K = x.shape
    _, N = w.shape
    TM, Mp = _pick_tile(M, 256)
    TN, Np = _pick_tile(N, 256)
    TK, Kp = _pick_tile(K, 512)

    x = x.astype(jnp.bfloat16)
    w = w.astype(jnp.bfloat16)
    xp = jnp.pad(x, ((0, Mp - M), (0, Kp - K))) if (Mp > M or Kp > K) else x
    wp = jnp.pad(w, ((0, Kp - K), (0, Np - N))) if (Kp > K or Np > N) else w
    sp = jnp.pad(scale.astype(jnp.float32), (0, Np - N)).reshape(1, Np)
    bp = jnp.pad(bias.astype(jnp.float32), (0, Np - N)).reshape(1, Np)

    grid = (Mp // TM, Np // TN, Kp // TK)
    out = pl.pallas_call(
        functools.partial(_mm_kernel, relu=relu),
        out_shape=jax.ShapeDtypeStruct((Mp, Np), jnp.bfloat16),
        grid_spec=pltpu.PrefetchScalarGridSpec(
            num_scalar_prefetch=0,
            grid=grid,
            in_specs=[
                pl.BlockSpec((TM, TK), lambda i, j, k: (i, k)),
                pl.BlockSpec((TK, TN), lambda i, j, k: (k, j)),
                pl.BlockSpec((1, TN), lambda i, j, k: (0, j)),
                pl.BlockSpec((1, TN), lambda i, j, k: (0, j)),
            ],
            out_specs=pl.BlockSpec((TM, TN), lambda i, j, k: (i, j)),
            scratch_shapes=[pltpu.VMEM((TM, TN), jnp.float32)]),
        compiler_params=pltpu.CompilerParams(
            dimension_semantics=("parallel", "parallel", "arbitrary"),
            vmem_limit_bytes=48 * 1024 * 1024),
    )(xp, wp, sp, bp)
    if Mp > M or Np > N:
        out = out[:M, :N]
    return out


# ----------------------------------------------------------------------------
# Pallas kernel 2: fused CSPN propagation (12 iterations, kernel_trans folded)
# ----------------------------------------------------------------------------
def _cspn_kernel(guide_ref, d0_ref, dsp_ref, mask_ref, out_ref, pbuf, gsh,
                 *, ks, n_iter, snap_every):
    pad = (ks - 1) // 2
    KK = ks * ks
    mid = (KK - 1) // 2
    H = d0_ref.shape[1]
    W = d0_ref.shape[2]

    d0 = d0_ref[0]                       # fixed coarse depth (H, W)
    m = mask_ref[0]
    md = m * dsp_ref[0]                  # mask * sparse depth, hoisted
    om = 1.0 - m

    # kernel_trans folded in: guide_trans[k] = guide[KK-1-k] shifted by
    # (k//ks - pad, k%ks - pad), zero outside.  The guide is loop-invariant,
    # so build the shifted slabs once; the 12-iter loop then reads aligned
    # full planes.
    gsh[...] = jnp.zeros(gsh.shape, gsh.dtype)
    for k in range(KK):
        if k == mid:
            continue
        oy = k // ks - pad
        ox = k % ks - pad
        y0, y1 = max(0, -oy), H - max(0, oy)
        x0, x1 = max(0, -ox), W - max(0, ox)
        gsh[k, y0:y1, x0:x1] = guide_ref[
            0, KK - 1 - k, y0 + oy:y1 + oy, x0 + ox:x1 + ox].astype(jnp.float32)

    # centre tap always multiplies the fixed coarse depth -> loop invariant
    base = md + om * (guide_ref[0, mid].astype(jnp.float32) * d0)

    # single zero-haloed depth buffer; halo stays zero, interior rewritten
    # in place at the end of each iteration (no carried-plane copy).
    pbuf[...] = jnp.zeros(pbuf.shape, pbuf.dtype)
    pbuf[pad:pad + H, pad:pad + W] = d0

    # TODO(synk): taps are unaligned static slices of the haloed buffer;
    #             pltpu.roll + boundary masks would move this work to the XLU.
    def body(i, carry):
        acc = jnp.zeros((H, W), jnp.float32)
        for k in range(KK):
            if k == mid:
                continue
            dy, dx = k // ks, k % ks
            acc = acc + gsh[k] * pbuf[dy:dy + H, dx:dx + W]
        dep_new = base + om * acc        # sparse-depth blend fused
        pbuf[pad:pad + H, pad:pad + W] = dep_new
        j = (i + 1) // snap_every - 1

        @pl.when((i + 1) % snap_every == 0)
        def _():
            out_ref[j] = dep_new[None]

        return carry

    lax.fori_loop(0, n_iter, body, 0)


@functools.partial(jax.jit, static_argnames=("ks",))
def cspn_propagate(guide, depth0, d_sparse, mask, *, ks):
    """guide:(B,ks*ks,H,W) (raw, NOT kernel_trans'ed); depth0/d_sparse/mask:
    (B,H,W) -> (4,B,H,W) snapshots after iterations 3/6/9/12."""
    B, KK, H, W = guide.shape
    pad = (ks - 1) // 2
    return pl.pallas_call(
        functools.partial(_cspn_kernel, ks=ks, n_iter=12, snap_every=3),
        out_shape=jax.ShapeDtypeStruct((4, B, H, W), jnp.float32),
        grid_spec=pltpu.PrefetchScalarGridSpec(
            num_scalar_prefetch=0,
            grid=(B,),
            in_specs=[
                pl.BlockSpec((1, KK, H, W), lambda b: (b, 0, 0, 0)),
                pl.BlockSpec((1, H, W), lambda b: (b, 0, 0)),
                pl.BlockSpec((1, H, W), lambda b: (b, 0, 0)),
                pl.BlockSpec((1, H, W), lambda b: (b, 0, 0)),
            ],
            out_specs=pl.BlockSpec((4, 1, H, W), lambda b: (0, b, 0, 0)),
            scratch_shapes=[
                pltpu.VMEM((H + 2 * pad, W + 2 * pad), jnp.float32),
                pltpu.VMEM((KK, H, W), jnp.float32),
            ]),
        compiler_params=pltpu.CompilerParams(
            dimension_semantics=("parallel",),
            vmem_limit_bytes=48 * 1024 * 1024),
    )(guide.astype(jnp.bfloat16), depth0.astype(jnp.float32),
      d_sparse.astype(jnp.float32), mask.astype(jnp.float32))


# ----------------------------------------------------------------------------
# Conv / deconv glue: NHWC, pre-transposed bf16 weight matrices
# ----------------------------------------------------------------------------
def conv2d_p(p, x, relu=False):
    """x: NHWC; p holds a pre-built (kh*kw*IC, OC) bf16 weight matrix."""
    kh, kw, stride = p['kh'], p['kw'], p['stride']
    pad = p['pad']
    if isinstance(pad, int):
        pad = (pad, pad, pad, pad)
    pt, pb, pleft, pright = pad
    B, H, W, C = x.shape
    x = x.astype(jnp.bfloat16)
    if pt or pb or pleft or pright:
        x = jnp.pad(x, ((0, 0), (pt, pb), (pleft, pright), (0, 0)))
    Hp, Wp = H + pt + pb, W + pleft + pright
    OH = (Hp - kh) // stride + 1
    OW = (Wp - kw) // stride + 1
    # TODO(synk): implicit-GEMM conv (haloed manual DMA inside the Pallas
    #             kernel) would remove this XLA-side patch materialization.
    taps = [x[:, i:i + stride * (OH - 1) + 1:stride,
              j:j + stride * (OW - 1) + 1:stride, :]
            for i in range(kh) for j in range(kw)]
    patches = taps[0] if len(taps) == 1 else jnp.concatenate(taps, axis=-1)
    rows = patches.reshape(B * OH * OW, kh * kw * C)
    out = matmul_bn_act(rows, p['wm'], p['scale'], p['bias'], relu=relu)
    return out.reshape(B, OH, OW, p['oc'])


def deconv2d_p(p, x, relu=True):
    """ConvTranspose2d.  k5/s2 deconvs run as ONE grouped-phase 3x3 conv on
    the un-dilated input (4 sub-pixel phases packed along OC), k3/s1 deconvs
    as a plain flipped conv."""
    if p['stride'] == 1:
        return conv2d_p(p['conv_equiv'], x, relu=relu)
    B, H, W, _ = x.shape
    oc = p['oc']
    y = conv2d_p(p['grouped'], x, relu=relu)          # (B, H, W, 4*oc)
    y = y.reshape(B, H, W, 2, 2, oc)                  # (.., py, px, oc)
    y = jnp.transpose(y, (0, 1, 3, 2, 4, 5))          # (B, H, py, W, px, oc)
    return y.reshape(B, 2 * H, 2 * W, oc)


# ----------------------------------------------------------------------------
# Deterministic parameter construction (matches PENet weights_init shapes)
# ----------------------------------------------------------------------------
_KEY = jax.random.PRNGKey(0)
_COUNTER = itertools.count()
BN_EPS = 1e-5


def _next_key():
    return jax.random.fold_in(_KEY, next(_COUNTER))


def conv_weight(oc, ic, kh, kw):
    n = kh * kw * oc
    return jax.random.normal(_next_key(), (oc, ic, kh, kw), jnp.float32) * np.sqrt(2.0 / n)


def deconv_weight(ic, oc, kh, kw):
    n = kh * kw * oc
    return jax.random.normal(_next_key(), (ic, oc, kh, kw), jnp.float32) * np.sqrt(2.0 / n)


def bn_fold(oc):
    gamma = jnp.ones((oc,), jnp.float32)
    beta = jnp.zeros((oc,), jnp.float32)
    mean = jnp.zeros((oc,), jnp.float32)
    var = jnp.ones((oc,), jnp.float32)
    scale = gamma / jnp.sqrt(var + BN_EPS)
    return scale, beta - mean * scale


def make_convbn(ic, oc, k=3, stride=1, pad=1):
    w = conv_weight(oc, ic, k, k)                         # (OC, IC, k, k)
    scale, bias = bn_fold(oc)
    wm = jnp.transpose(w, (2, 3, 1, 0)).reshape(k * k * ic, oc).astype(jnp.bfloat16)
    return dict(wm=wm, kh=k, kw=k, stride=stride, pad=pad, oc=oc,
                scale=scale, bias=bias)


def make_deconvbn(ic, oc, k=5, stride=2, pad=2, outpad=1):
    w_t = deconv_weight(ic, oc, k, k)                     # (IC, OC, k, k)
    scale, bias = bn_fold(oc)
    w_conv = jnp.flip(w_t, (2, 3)).transpose(1, 0, 2, 3)  # (OC, IC, k, k)
    if stride == 1:
        plo = k - 1 - pad
        phi = plo + outpad
        wm = jnp.transpose(w_conv, (2, 3, 1, 0)).reshape(k * k * ic, oc).astype(jnp.bfloat16)
        return dict(stride=1, oc=oc,
                    conv_equiv=dict(wm=wm, kh=k, kw=k, stride=1,
                                    pad=(plo, phi, plo, phi), oc=oc,
                                    scale=scale, bias=bias))
    assert stride == 2 and k == 5 and pad == 2 and outpad == 1
    # Embed the 4 sub-pixel phase kernels into one 3x3 kernel with 4*OC
    # output channels (zeros where a phase has no tap).
    w_np = np.asarray(w_conv)
    emb = np.zeros((oc, ic, 3, 3, 4), np.float32)         # (.., r, c, phase)
    for py in range(2):
        for px in range(2):
            q = 2 * py + px
            for r in range(3):
                kk = 2 * r if py == 0 else 2 * r - 1
                if kk < 0:
                    continue
                for c in range(3):
                    ll = 2 * c if px == 0 else 2 * c - 1
                    if ll < 0:
                        continue
                    emb[:, :, r, c, q] = w_np[:, :, kk, ll]
    wm = jnp.asarray(emb.transpose(2, 3, 1, 4, 0).reshape(9 * ic, 4 * oc),
                     dtype=jnp.bfloat16)
    return dict(stride=2, oc=oc,
                grouped=dict(wm=wm, kh=3, kw=3, stride=1, pad=1, oc=4 * oc,
                             scale=jnp.tile(scale, 4), bias=jnp.tile(bias, 4)))


def make_block(inplanes, planes, stride, geoplanes=3):
    blk = dict(conv1=make_convbn(inplanes + geoplanes, planes, 3, stride, 1),
               conv2=make_convbn(planes + geoplanes, planes, 3, 1, 1))
    if stride != 1 or inplanes != planes:
        blk['down'] = make_convbn(inplanes + geoplanes, planes, 1, stride, 0)
    return blk


def build_params():
    bb = {}
    bb['rgb_conv_init'] = make_convbn(4, 32, 5, 1, 2)
    rgb_cfg = [(32, 64, 2), (64, 64, 1), (64, 128, 2), (128, 128, 1),
               (128, 256, 2), (256, 256, 1), (256, 512, 2), (512, 512, 1),
               (512, 1024, 2), (1024, 1024, 1)]
    bb['rgb_enc'] = [make_block(i, p, s) for (i, p, s) in rgb_cfg]
    bb['rgb_dec8'] = make_deconvbn(1024, 512)
    bb['rgb_dec6'] = make_deconvbn(512, 256)
    bb['rgb_dec4'] = make_deconvbn(256, 128)
    bb['rgb_dec2'] = make_deconvbn(128, 64)
    bb['rgb_dec0'] = make_deconvbn(64, 32)
    bb['rgb_dec_out'] = make_deconvbn(32, 2, 3, 1, 1, 0)
    bb['depth_conv_init'] = make_convbn(2, 32, 5, 1, 2)
    d_cfg = [(32, 64, 2), (64, 64, 1), (128, 128, 2), (128, 128, 1),
             (256, 256, 2), (256, 256, 1), (512, 512, 2), (512, 512, 1),
             (1024, 1024, 2), (1024, 1024, 1)]
    bb['depth_enc'] = [make_block(i, p, s) for (i, p, s) in d_cfg]
    bb['dec1'] = make_deconvbn(1024, 512)
    bb['dec2'] = make_deconvbn(512, 256)
    bb['dec3'] = make_deconvbn(256, 128)
    bb['dec4'] = make_deconvbn(128, 64)
    bb['dec5'] = make_deconvbn(64, 32)
    bb['dec6'] = make_convbn(32, 2, 3, 1, 1)
    return dict(backbone=bb,
                mask_layer=make_convbn(64, 3),
                kernel_conf_layer=make_convbn(64, 3),
                iter_conf_layer=make_convbn(64, 12),
                guide3=make_convbn(64, 8),
                guide5=make_convbn(64, 24),
                guide7=make_convbn(64, 48))


# ----------------------------------------------------------------------------
# Layer application helpers (NHWC)
# ----------------------------------------------------------------------------
def apply_convbn(p, x, relu=False):
    return conv2d_p(p, x, relu=relu)


def apply_deconvbnrelu(p, x):
    return deconv2d_p(p, x, relu=True)


def apply_block(p, x, g1, g2):
    xcat = jnp.concatenate([x, g1], axis=-1)
    out = apply_convbn(p['conv1'], xcat, relu=True)
    out = jnp.concatenate([g2, out], axis=-1)
    out = apply_convbn(p['conv2'], out, relu=False)
    identity = apply_convbn(p['down'], xcat, relu=False) if 'down' in p else x
    return jnp.maximum(out + identity, 0.0)


def avgpool2(x):
    B, H, W, C = x.shape
    return x.reshape(B, H // 2, 2, W // 2, 2, C).mean(axis=(2, 4))


def maxpool2(x):
    B, H, W, C = x.shape
    return x.reshape(B, H // 2, 2, W // 2, 2, C).max(axis=(2, 4))


def sparse_downsample(d, mask):
    encode_d = -(1.0 - mask) * 600.0 - d
    d_pool = -maxpool2(encode_d)
    mask_r = maxpool2(mask)
    return d_pool - (1.0 - mask_r) * 600.0, mask_r


def geo_feature(z, vnorm, unorm, h, w, ch, cw, fh, fw):
    x = z * (0.5 * h * (vnorm + 1) - ch) / fh
    y = z * (0.5 * w * (unorm + 1) - cw) / fw
    return jnp.concatenate([x, y, z], axis=-1).astype(jnp.bfloat16)


# ----------------------------------------------------------------------------
# ENet backbone forward (NHWC internally)
# ----------------------------------------------------------------------------
def enet_forward(p, rgb, d, position, Kmat):
    unorm = position[..., 0:1]
    vnorm = position[..., 1:2]
    vnorm_s2 = avgpool2(vnorm); vnorm_s3 = avgpool2(vnorm_s2)
    vnorm_s4 = avgpool2(vnorm_s3); vnorm_s5 = avgpool2(vnorm_s4)
    vnorm_s6 = avgpool2(vnorm_s5)
    unorm_s2 = avgpool2(unorm); unorm_s3 = avgpool2(unorm_s2)
    unorm_s4 = avgpool2(unorm_s3); unorm_s5 = avgpool2(unorm_s4)
    unorm_s6 = avgpool2(unorm_s5)

    valid_mask = jnp.where(d > 0, 1.0, 0.0)
    d_s2, vm_s2 = sparse_downsample(d, valid_mask)
    d_s3, vm_s3 = sparse_downsample(d_s2, vm_s2)
    d_s4, vm_s4 = sparse_downsample(d_s3, vm_s3)
    d_s5, vm_s5 = sparse_downsample(d_s4, vm_s4)
    d_s6, vm_s6 = sparse_downsample(d_s5, vm_s5)

    f352 = Kmat[:, 1, 1].reshape(-1, 1, 1, 1)
    c352 = Kmat[:, 1, 2].reshape(-1, 1, 1, 1)
    f1216 = Kmat[:, 0, 0].reshape(-1, 1, 1, 1)
    c1216 = Kmat[:, 0, 2].reshape(-1, 1, 1, 1)

    geo_s1 = geo_feature(d, vnorm, unorm, 1080, 1920, c352, c1216, f352, f1216)
    geo_s2 = geo_feature(d_s2, vnorm_s2, unorm_s2, 1080 / 2, 1920 / 2, c352, c1216, f352, f1216)
    geo_s3 = geo_feature(d_s3, vnorm_s3, unorm_s3, 1080 / 4, 1920 / 4, c352, c1216, f352, f1216)
    geo_s4 = geo_feature(d_s4, vnorm_s4, unorm_s4, 1080 / 8, 1920 / 8, c352, c1216, f352, f1216)
    geo_s5 = geo_feature(d_s5, vnorm_s5, unorm_s5, 1080 / 16, 1920 / 16, c352, c1216, f352, f1216)
    geo_s6 = geo_feature(d_s6, vnorm_s6, unorm_s6, 1080 / 32, 1920 / 32, c352, c1216, f352, f1216)

    rgb_feature = apply_convbn(p['rgb_conv_init'], jnp.concatenate([rgb, d], -1), relu=True)
    e = p['rgb_enc']
    rf1 = apply_block(e[0], rgb_feature, geo_s1, geo_s2)
    rf2 = apply_block(e[1], rf1, geo_s2, geo_s2)
    rf3 = apply_block(e[2], rf2, geo_s2, geo_s3)
    rf4 = apply_block(e[3], rf3, geo_s3, geo_s3)
    rf5 = apply_block(e[4], rf4, geo_s3, geo_s4)
    rf6 = apply_block(e[5], rf5, geo_s4, geo_s4)
    rf7 = apply_block(e[6], rf6, geo_s4, geo_s5)
    rf8 = apply_block(e[7], rf7, geo_s5, geo_s5)
    rf9 = apply_block(e[8], rf8, geo_s5, geo_s6)
    rf10 = apply_block(e[9], rf9, geo_s6, geo_s6)

    rd8 = apply_deconvbnrelu(p['rgb_dec8'], rf10); r8p = rd8 + rf8
    rd6 = apply_deconvbnrelu(p['rgb_dec6'], r8p);  r6p = rd6 + rf6
    rd4 = apply_deconvbnrelu(p['rgb_dec4'], r6p);  r4p = rd4 + rf4
    rd2 = apply_deconvbnrelu(p['rgb_dec2'], r4p);  r2p = rd2 + rf2
    rd0 = apply_deconvbnrelu(p['rgb_dec0'], r2p);  r0p = rd0 + rgb_feature
    rgb_output = apply_deconvbnrelu(p['rgb_dec_out'], r0p)
    rgb_depth = rgb_output[..., 0:1]
    rgb_conf = rgb_output[..., 1:2]

    sf = apply_convbn(p['depth_conv_init'], jnp.concatenate([d, rgb_depth], -1), relu=True)
    dl = p['depth_enc']
    sf1 = apply_block(dl[0], sf, geo_s1, geo_s2)
    sf2 = apply_block(dl[1], sf1, geo_s2, geo_s2)
    sf2p = jnp.concatenate([r2p, sf2], -1)
    sf3 = apply_block(dl[2], sf2p, geo_s2, geo_s3)
    sf4 = apply_block(dl[3], sf3, geo_s3, geo_s3)
    sf4p = jnp.concatenate([r4p, sf4], -1)
    sf5 = apply_block(dl[4], sf4p, geo_s3, geo_s4)
    sf6 = apply_block(dl[5], sf5, geo_s4, geo_s4)
    sf6p = jnp.concatenate([r6p, sf6], -1)
    sf7 = apply_block(dl[6], sf6p, geo_s4, geo_s5)
    sf8 = apply_block(dl[7], sf7, geo_s5, geo_s5)
    sf8p = jnp.concatenate([r8p, sf8], -1)
    sf9 = apply_block(dl[8], sf8p, geo_s5, geo_s6)
    sf10 = apply_block(dl[9], sf9, geo_s6, geo_s6)

    fusion1 = rf10 + sf10
    df1 = apply_deconvbnrelu(p['dec1'], fusion1)
    fusion2 = sf8 + df1
    df2 = apply_deconvbnrelu(p['dec2'], fusion2)
    fusion3 = sf6 + df2
    df3 = apply_deconvbnrelu(p['dec3'], fusion3)
    fusion4 = sf4 + df3
    df4 = apply_deconvbnrelu(p['dec4'], fusion4)
    fusion5 = sf2 + df4
    df5 = apply_deconvbnrelu(p['dec5'], fusion5)
    depth_output = apply_convbn(p['dec6'], df5, relu=True)
    d_depth, d_conf = depth_output[..., 0:1], depth_output[..., 1:2]

    cc = jax.nn.softmax(jnp.concatenate([rgb_conf, d_conf], -1), axis=-1)
    rgb_conf_n, d_conf_n = cc[..., 0:1], cc[..., 1:2]
    output = rgb_conf_n * rgb_depth + d_conf_n * d_depth
    feature = jnp.concatenate([r0p, df5], -1)  # dilation_rate == 1, model != 'e'
    return feature, output


# ----------------------------------------------------------------------------
# CSPN head
# ----------------------------------------------------------------------------
def cspn_generate(p, feature, ks):
    """Returns the raw (un-kernel_trans'ed) guide as (B, ks*ks, H, W)."""
    guide = apply_convbn(p, feature, relu=False).astype(jnp.float32)  # (B,H,W,KK-1)
    gsum = jnp.sum(jnp.abs(guide), axis=-1, keepdims=True)
    # guard only against exactly-zero rows (original would produce NaN there)
    guide = guide / jnp.where(gsum == 0.0, 1.0, gsum)
    gmid = 1.0 - jnp.sum(guide, axis=-1, keepdims=True)
    half = (ks * ks - 1) // 2
    g = jnp.concatenate([guide[..., :half], gmid, guide[..., half:]], axis=-1)
    return jnp.transpose(g, (0, 3, 1, 2))   # (B, KK, H, W); kernel_trans is
                                            # folded into the CSPN kernel.


def penet_c1_forward(params, rgb, d, position, Kmat):
    # NCHW (public interface) -> NHWC (internal)
    rgb_n = jnp.transpose(rgb, (0, 2, 3, 1))
    d_n = jnp.transpose(d, (0, 2, 3, 1))
    pos_n = jnp.transpose(position, (0, 2, 3, 1))

    valid_mask = jnp.where(d_n > 0, 1.0, 0.0)
    feature, coarse_depth = enet_forward(params['backbone'], rgb_n, d_n, pos_n, Kmat)

    mask = jax.nn.sigmoid(apply_convbn(params['mask_layer'], feature)) * valid_mask
    kconf = jax.nn.softmax(apply_convbn(params['kernel_conf_layer'], feature),
                           axis=-1).astype(jnp.float32)
    conf = apply_convbn(params['iter_conf_layer'], feature)
    conf3 = jax.nn.softmax(conf[..., 0:4], axis=-1).astype(jnp.float32)
    conf5 = jax.nn.softmax(conf[..., 4:8], axis=-1).astype(jnp.float32)
    conf7 = jax.nn.softmax(conf[..., 8:12], axis=-1).astype(jnp.float32)

    guide3 = cspn_generate(params['guide3'], feature, 3)
    guide5 = cspn_generate(params['guide5'], feature, 5)
    guide7 = cspn_generate(params['guide7'], feature, 7)

    depth0 = coarse_depth[..., 0].astype(jnp.float32)   # (B, H, W)
    dsp = d_n[..., 0]                                    # sparse depth

    snaps3 = cspn_propagate(guide3, depth0, dsp, mask[..., 0], ks=3)  # (4,B,H,W)
    snaps5 = cspn_propagate(guide5, depth0, dsp, mask[..., 1], ks=5)
    snaps7 = cspn_propagate(guide7, depth0, dsp, mask[..., 2], ks=7)

    kc3, kc5, kc7 = kconf[..., 0], kconf[..., 1], kconf[..., 2]
    refined = jnp.zeros_like(depth0)
    for j in range(4):
        refined = refined + snaps3[j] * (kc3 * conf3[..., j])
        refined = refined + snaps5[j] * (kc5 * conf5[..., j])
        refined = refined + snaps7[j] * (kc7 * conf7[..., j])
    return refined[:, None, :, :]   # back to NCHW (B, 1, H, W)


# ----------------------------------------------------------------------------
# Main
# ----------------------------------------------------------------------------
if __name__ == "__main__":
    B, H, W = 2, 32, 32   # H, W must be divisible by 32 (5 stride-2 stages)
    params = build_params()

    key = jax.random.PRNGKey(0)
    k1, k2, k3 = jax.random.split(key, 3)
    rgb = jax.random.uniform(k1, (B, 3, H, W), jnp.float32)
    dense_depth = jax.random.uniform(k2, (B, 1, H, W), jnp.float32) * 10.0
    keep = (jax.random.uniform(k3, (B, 1, H, W)) < 0.3).astype(jnp.float32)
    d = dense_depth * keep  # sparse depth
    v, u = jnp.meshgrid(jnp.linspace(-1.0, 1.0, H), jnp.linspace(-1.0, 1.0, W),
                        indexing="ij")
    position = jnp.broadcast_to(jnp.stack([u, v])[None], (B, 2, H, W)).astype(jnp.float32)
    Kmat = jnp.broadcast_to(
        jnp.array([[400.0, 0.0, W / 2.0],
                   [0.0, 400.0, H / 2.0],
                   [0.0, 0.0, 1.0]], jnp.float32)[None], (B, 3, 3))

    out = penet_c1_forward(params, rgb, d, position, Kmat)
    out = jax.block_until_ready(out)
    assert out.shape == (B, 1, H, W), out.shape
    assert bool(jnp.all(jnp.isfinite(out)))
    print("KERNEL_OK")
</pallas_src>

<mosaic_0001>
module attributes {stable_mosaic.version = 11 : i64} {
  func.func @_mm_kernel(%arg0: i32, %arg1: i32, %arg2: i32, %arg3: memref<256x128xbf16, #tpu.memory_space<vmem>>, %arg4: memref<128x128xbf16, #tpu.memory_space<vmem>>, %arg5: memref<1x128xf32, #tpu.memory_space<vmem>>, %arg6: memref<1x128xf32, #tpu.memory_space<vmem>>, %arg7: memref<256x128xbf16, #tpu.memory_space<vmem>>, %arg8: memref<256x128xf32, #tpu.memory_space<vmem>>) attributes {dimension_semantics = [#tpu.dimension_semantics<parallel>, #tpu.dimension_semantics<parallel>, #tpu.dimension_semantics<arbitrary>], iteration_bounds = array<i64: 8, 1, 1>, scalar_prefetch = 0 : i64, scratch_operands = 1 : i64, tpu.core_type = #tpu.core_type<tc>, window_params = [{transform_indices = @transform_0, window_bounds = array<i64: 256, 128>}, {transform_indices = @transform_1, window_bounds = array<i64: 128, 128>}, {transform_indices = @transform_2, window_bounds = array<i64: 1, 128>}, {transform_indices = @transform_3, window_bounds = array<i64: 1, 128>}, {transform_indices = @transform_4, window_bounds = array<i64: 256, 128>}]} {
    %c0_i32 = arith.constant 0 : i32
    %0 = arith.cmpi eq, %arg2, %c0_i32 : i32
    %1 = arith.extui %0 : i1 to i32
    %c0_i32_0 = arith.constant 0 : i32
    %2 = arith.cmpi ne, %1, %c0_i32_0 : i32
    scf.if %2 {
      %cst_10 = arith.constant 0.000000e+00 : f32
      %12 = vector.broadcast %cst_10 : f32 to vector<256x128xf32>
      %c0_11 = arith.constant 0 : index
      %c0_12 = arith.constant 0 : index
      %13 = vector.load %arg8[%c0_11, %c0_12] : memref<256x128xf32, #tpu.memory_space<vmem>>, vector<256x128xf32>
      tpu.vector_store %arg8[%c0_11, %c0_12], %12 {strides = array<i32>} : memref<256x128xf32, #tpu.memory_space<vmem>>, vector<256x128xf32>,
    } else {
    }
    %c0 = arith.constant 0 : index
    %c0_1 = arith.constant 0 : index
    %3 = vector.load %arg8[%c0, %c0_1] : memref<256x128xf32, #tpu.memory_space<vmem>>, vector<256x128xf32>
    %c0_2 = arith.constant 0 : index
    %c0_3 = arith.constant 0 : index
    %4 = vector.load %arg3[%c0_2, %c0_3] : memref<256x128xbf16, #tpu.memory_space<vmem>>, vector<256x128xbf16>
    %c0_4 = arith.constant 0 : index
    %c0_5 = arith.constant 0 : index
    %5 = vector.load %arg4[%c0_4, %c0_5] : memref<128x128xbf16, #tpu.memory_space<vmem>>, vector<128x128xbf16>
    %cst = arith.constant dense<0.000000e+00> : vector<256x128xf32>
    %6 = tpu.matmul %4, %5, %cst {dimension_numbers = #tpu.dot_dimension_numbers<[1], [0], [0], [1], [0, 0, 1, 1], [], []>} : vector<256x128xbf16>, vector<128x128xbf16>, vector<256x128xf32> -> vector<256x128xf32>
    %7 = arith.addf %3, %6 : vector<256x128xf32>
    %c0_6 = arith.constant 0 : index
    %c0_7 = arith.constant 0 : index
    %8 = vector.load %arg8[%c0_6, %c0_7] : memref<256x128xf32, #tpu.memory_space<vmem>>, vector<256x128xf32>
    tpu.vector_store %arg8[%c0_6, %c0_7], %7 {strides = array<i32>} : memref<256x128xf32, #tpu.memory_space<vmem>>, vector<256x128xf32>,
    %c0_i32_8 = arith.constant 0 : i32
    %9 = arith.cmpi eq, %arg2, %c0_i32_8 : i32
    %10 = arith.extui %9 : i1 to i32
    %c0_i32_9 = arith.constant 0 : i32
    %11 = arith.cmpi ne, %10, %c0_i32_9 : i32
    scf.if %11 {
      %c0_10 = arith.constant 0 : index
      %c0_11 = arith.constant 0 : index
      %12 = vector.load %arg8[%c0_10, %c0_11] : memref<256x128xf32, #tpu.memory_space<vmem>>, vector<256x128xf32>
      %c0_12 = arith.constant 0 : index
      %c0_13 = arith.constant 0 : index
      %13 = vector.load %arg5[%c0_12, %c0_13] : memref<1x128xf32, #tpu.memory_space<vmem>>, vector<1x128xf32>
      %14 = vector.broadcast %13 : vector<1x128xf32> to vector<256x128xf32>
      %15 = arith.mulf %12, %14 : vector<256x128xf32>
      %c0_14 = arith.constant 0 : index
      %c0_15 = arith.constant 0 : index
      %16 = vector.load %arg6[%c0_14, %c0_15] : memref<1x128xf32, #tpu.memory_space<vmem>>, vector<1x128xf32>
      %17 = vector.broadcast %16 : vector<1x128xf32> to vector<256x128xf32>
      %18 = arith.addf %15, %17 : vector<256x128xf32>
      %cst_16 = arith.constant 0.000000e+00 : f32
      %19 = vector.broadcast %cst_16 : f32 to vector<256x128xf32>
      %20 = arith.maximumf %18, %19 : vector<256x128xf32>
      %21 = arith.truncf %20 : vector<256x128xf32> to vector<256x128xbf16>
      %c0_17 = arith.constant 0 : index
      %c0_18 = arith.constant 0 : index
      %22 = vector.load %arg7[%c0_17, %c0_18] : memref<256x128xbf16, #tpu.memory_space<vmem>>, vector<256x128xbf16>
      tpu.vector_store %arg7[%c0_17, %c0_18], %21 {strides = array<i32>} : memref<256x128xbf16, #tpu.memory_space<vmem>>, vector<256x128xbf16>,
    } else {
    }
    return
  }
  func.func @transform_0(%arg0: i32, %arg1: i32, %arg2: i32) -> (i32, i32) {
    %c0_i32 = arith.constant 0 : i32
    return %arg0, %arg2 : i32, i32
  }
  func.func @transform_1(%arg0: i32, %arg1: i32, %arg2: i32) -> (i32, i32) {
    %c0_i32 = arith.constant 0 : i32
    return %arg2, %arg1 : i32, i32
  }
  func.func @transform_2(%arg0: i32, %arg1: i32, %arg2: i32) -> (i32, i32) {
    %c0_i32 = arith.constant 0 : i32
    %c0_i32_0 = arith.constant 0 : i32
    return %c0_i32, %arg1 : i32, i32
  }
  func.func @transform_3(%arg0: i32, %arg1: i32, %arg2: i32) -> (i32, i32) {
    %c0_i32 = arith.constant 0 : i32
    %c0_i32_0 = arith.constant 0 : i32
    return %c0_i32, %arg1 : i32, i32
  }
  func.func @transform_4(%arg0: i32, %arg1: i32, %arg2: i32) -> (i32, i32) {
    %c0_i32 = arith.constant 0 : i32
    return %arg0, %arg1 : i32, i32
  }
}

</mosaic_0001>

<llo_original>
// kernel: matmul_bn_act.1
$region0: #{matmul_bn_act.1}
  #allocation0 [shape = 'u32[]', space=smem, size = 0x4, offset = 0x4, fixed_abs, tag = 'smem constant byte address 0x4 - core index']
  #allocation1 [shape = 'u32[144,128]{1,0:T(1,128)}', space=vmem, size = 0x12000, scoped, tag = 'internal scratch']
  #allocation2 [shape = 'f32[256,128]{1,0:T(8,128)}', space=vmem, size = 0x20000, scoped, tag = 'scratch operand']
  %s0 = inlined_call_operand.vmem [shape: bf16[2048,128], index: 0, kind: input, shape index: {}]
  %s1 = inlined_call_operand.vmem [shape: bf16[128,128], index: 1, kind: input, shape index: {}]
  %s2 = inlined_call_operand.vmem [shape: f32[1,128], index: 2, kind: input, shape index: {}]
  %s3 = inlined_call_operand.vmem [shape: f32[1,128], index: 3, kind: input, shape index: {}]
  %s4 = inlined_call_operand.vmem [shape: bf16[2048,128], index: 4, kind: output, shape index: {}]
  %s5 = sld [smem:[#allocation0]]
  $region57: #{matmul_bn_act.1} parent=0
    _
  %s7 = ssub.s32 1, %s5
  %s8 = scalar_select 0, %s7, %s5
  loop: start=0, step=1, limit=10
  $region2: #{matmul_bn_act.1} parent=0 // loop_pre_header
    _
  $region3: #{matmul_bn_act.1} parent=0 // loop_header
    %s10 = sphi 0, %s14
    %p11 = scmp.ge.s32.totalorder %s10, 10
    %s17 = sphi 0, %s36
    %s18 = sphi 0, %s32
    %s19 = sphi 0, %s28
    %s20 = sphi 0, %s17
    %s21 = sphi 0, %s18
    %s22 = sphi 0, %s19
    %s23 = sphi 0, %s20
    %s24 = sphi 0, %s21
    %s25 = sphi 0, %s22
    %s41 = sphi 0, %s43
    %s44 = sphi 0, %s41
    %s45 = sphi 0, %s44
    %s61 = sphi 0, %s45
    %s69 = sphi 0, %s71
    %s72 = sphi 0, %s69
    %s73 = sphi 0, %s72
    %s89 = sphi 0, %s73
    %s95 = sphi 0, %s97
    %s98 = sphi 0, %s95
    %s99 = sphi 0, %s98
    %s115 = sphi 0, %s99
    %s121 = sphi 0, %s123
    %s124 = sphi 0, %s121
    %s125 = sphi 0, %s124
    %s141 = sphi 0, %s125
    %s149 = sphi 0, %s151
    %s152 = sphi 0, %s149
    %s153 = sphi 0, %s152
    %s169 = sphi 0, %s153
  $region4: #{matmul_bn_act.1} parent=0 // loop_header_branch
    %13 = sbr.rel (%p11) target = $region8
  $region5: #{matmul_bn_act.1} parent=0 // loop_body
    %s15 = ssub.s32 %s10, 1
    %s16 = ssub.s32 %s10, 2
    %s26 = sadd.s32 1, %s19
    %p27 = scmp.ge.s32.totalorder %s26, 1
    %s28 = scalar_select %p27, 0, %s26
    %s29 = sadd.s32 1, %s18
    %s30 = scalar_select %p27, %s29, %s18
    %p31 = scmp.ge.s32.totalorder %s30, 1
    %s32 = scalar_select %p31, 0, %s30
    %s33 = sadd.s32 1, %s17
    %s34 = scalar_select %p31, %s33, %s17
    %p35 = scmp.ge.s32.totalorder %s34, 8
    %s36 = scalar_select %p35, 0, %s34
    %s37 = ssub.s32 %s17, %s36
    %s38 = ssub.s32 %s19, %s28
    %s39 = sor.u32 %s37, %s38
    %p40 = scmp.eq.s32.totalorder %s39, 0
    %s42 = sadd.s32 %s41, 1
    %s43 = scalar_select %p40, %s41, %s42
    %p46 = pneg %p40
    %p47 = scmp.eq.s32.totalorder %s10, 7
    %p48 = por %p46, %p47
    %p49 = scmp.ne.s32.totalorder %s41, %s44
    %p50 = scmp.eq.s32.totalorder %s10, 0
    %p51 = por %p49, %p50
    %p52 = scmp.ne.s32.totalorder %s41, %s44
    %p53 = scmp.eq.s32.totalorder %s15, 7
    %p54 = por %p52, %p53
    %p55 = scmp.ne.s32.totalorder %s44, %s45
    %p56 = scmp.eq.s32.totalorder %s15, 0
    %p57 = por %p55, %p56
    %p58 = scmp.ne.s32.totalorder %s44, %s45
    %p59 = scmp.eq.s32.totalorder %s16, 7
    %p60 = por %p58, %p59
    %p62 = scmp.ne.s32.totalorder %s45, %s61
    %p63 = scmp.eq.s32.totalorder %s16, 0
    %p64 = por %p62, %p63
    %s65 = ssub.s32 %s19, %s28
    %s66 = ssub.s32 %s18, %s32
    %s67 = sor.u32 %s65, %s66
    %p68 = scmp.eq.s32.totalorder %s67, 0
    %s70 = sadd.s32 %s69, 1
    %s71 = scalar_select %p68, %s69, %s70
    %p74 = pneg %p68
    %p75 = scmp.eq.s32.totalorder %s10, 7
    %p76 = por %p74, %p75
    %p77 = scmp.ne.s32.totalorder %s69, %s72
    %p78 = scmp.eq.s32.totalorder %s10, 0
    %p79 = por %p77, %p78
    %p80 = scmp.ne.s32.totalorder %s69, %s72
    %p81 = scmp.eq.s32.totalorder %s15, 7
    %p82 = por %p80, %p81
    %p83 = scmp.ne.s32.totalorder %s72, %s73
    %p84 = scmp.eq.s32.totalorder %s15, 0
    %p85 = por %p83, %p84
    %p86 = scmp.ne.s32.totalorder %s72, %s73
    %p87 = scmp.eq.s32.totalorder %s16, 7
    %p88 = por %p86, %p87
    %p90 = scmp.ne.s32.totalorder %s73, %s89
    %p91 = scmp.eq.s32.totalorder %s16, 0
    %p92 = por %p90, %p91
    %s93 = ssub.s32 %s18, %s32
    %p94 = scmp.eq.s32.totalorder %s93, 0
    %s96 = sadd.s32 %s95, 1
    %s97 = scalar_select %p94, %s95, %s96
    %p100 = pneg %p94
    %p101 = scmp.eq.s32.totalorder %s10, 7
    %p102 = por %p100, %p101
    %p103 = scmp.ne.s32.totalorder %s95, %s98
    %p104 = scmp.eq.s32.totalorder %s10, 0
    %p105 = por %p103, %p104
    %p106 = scmp.ne.s32.totalorder %s95, %s98
    %p107 = scmp.eq.s32.totalorder %s15, 7
    %p108 = por %p106, %p107
    %p109 = scmp.ne.s32.totalorder %s98, %s99
    %p110 = scmp.eq.s32.totalorder %s15, 0
    %p111 = por %p109, %p110
    %p112 = scmp.ne.s32.totalorder %s98, %s99
    %p113 = scmp.eq.s32.totalorder %s16, 7
    %p114 = por %p112, %p113
    %p116 = scmp.ne.s32.totalorder %s99, %s115
    %p117 = scmp.eq.s32.totalorder %s16, 0
    %p118 = por %p116, %p117
    %s119 = ssub.s32 %s18, %s32
    %p120 = scmp.eq.s32.totalorder %s119, 0
    %s122 = sadd.s32 %s121, 1
    %s123 = scalar_select %p120, %s121, %s122
    %p126 = pneg %p120
    %p127 = scmp.eq.s32.totalorder %s10, 7
    %p128 = por %p126, %p127
    %p129 = scmp.ne.s32.totalorder %s121, %s124
    %p130 = scmp.eq.s32.totalorder %s10, 0
    %p131 = por %p129, %p130
    %p132 = scmp.ne.s32.totalorder %s121, %s124
    %p133 = scmp.eq.s32.totalorder %s15, 7
    %p134 = por %p132, %p133
    %p135 = scmp.ne.s32.totalorder %s124, %s125
    %p136 = scmp.eq.s32.totalorder %s15, 0
    %p137 = por %p135, %p136
    %p138 = scmp.ne.s32.totalorder %s124, %s125
    %p139 = scmp.eq.s32.totalorder %s16, 7
    %p140 = por %p138, %p139
    %p142 = scmp.ne.s32.totalorder %s125, %s141
    %p143 = scmp.eq.s32.totalorder %s16, 0
    %p144 = por %p142, %p143
    %s145 = ssub.s32 %s17, %s36
    %s146 = ssub.s32 %s18, %s32
    %s147 = sor.u32 %s145, %s146
    %p148 = scmp.eq.s32.totalorder %s147, 0
    %s150 = sadd.s32 %s149, 1
    %s151 = scalar_select %p148, %s149, %s150
    %p154 = pneg %p148
    %p155 = scmp.eq.s32.totalorder %s10, 7
    %p156 = por %p154, %p155
    %p157 = scmp.ne.s32.totalorder %s149, %s152
    %p158 = scmp.eq.s32.totalorder %s10, 0
    %p159 = por %p157, %p158
    %p160 = scmp.ne.s32.totalorder %s149, %s152
    %p161 = scmp.eq.s32.totalorder %s15, 7
    %p162 = por %p160, %p161
    %p163 = scmp.ne.s32.totalorder %s152, %s153
    %p164 = scmp.eq.s32.totalorder %s15, 0
    %p165 = por %p163, %p164
    %p166 = scmp.ne.s32.totalorder %s152, %s153
    %p167 = scmp.eq.s32.totalorder %s16, 7
    %p168 = por %p166, %p167
    %p170 = scmp.ne.s32.totalorder %s153, %s169
    %p171 = scmp.eq.s32.totalorder %s16, 0
    %p172 = por %p170, %p171
    %p173 = scmp.le.s32.totalorder 1, %s10
    %p174 = scmp.lt.s32.totalorder %s10, 9
    %p175 = pnand %p173, %p174
    %p176 = pneg %p175
    // Predicated region
    $region9: #{matmul_bn_act.1} parent=5 // pred_check
      _
    $region10: #{matmul_bn_act.1} parent=5 // pred_check_branch
      %178 = sbr.rel (%p175) target = $region12
    $region11: #{matmul_bn_act.1} parent=5 // pred_region
      %s179 = ssub.s32 %s10, 1
      // Predicated region
      $region13: #{matmul_bn_act.1} parent=11 // pred_check
        %p180 = pneg %p85
      $region14: #{matmul_bn_act.1} parent=11 // pred_check_branch
        %182 = sbr.rel (%p180) target = $region16
      $region15: #{matmul_bn_act.1} parent=11 // pred_region
        %s183 = smul.u32 16, %s22
        %p184 = scmp.lt.s32.totalorder %s183, 15
        %s185 = scalar_select %p184, %s183, 15
        %p186 = scmp.lt.s32.totalorder %s21, 0
        %s187 = scalar_select %p186, %s21, 0
        %s188 = sadd.s32 %s187, %s185
        %s189 = smul.addr %s188, 4
        %s190 = scalar_lea.vmem %s1, %s189
        %s191 = smul.u32 16, %s22
      $region16: #{matmul_bn_act.1} parent=11 // pred_fallthru
        _
      // Predicated region
      $region17: #{matmul_bn_act.1} parent=11 // pred_check
        %p192 = pneg %p111
      $region18: #{matmul_bn_act.1} parent=11 // pred_check_branch
        %194 = sbr.rel (%p192) target = $region20
      $region19: #{matmul_bn_act.1} parent=11 // pred_region
        %p195 = scmp.lt.s32.totalorder %s21, 0
        %s196 = scalar_select %p195, %s21, 0
        %s197 = scalar_lea.vmem %s2, %s196
      $region20: #{matmul_bn_act.1} parent=11 // pred_fallthru
        _
      // Predicated region
      $region21: #{matmul_bn_act.1} parent=11 // pred_check
        %p198 = pneg %p137
      $region22: #{matmul_bn_act.1} parent=11 // pred_check_branch
        %200 = sbr.rel (%p198) target = $region24
      $region23: #{matmul_bn_act.1} parent=11 // pred_region
        %p201 = scmp.lt.s32.totalorder %s21, 0
        %s202 = scalar_select %p201, %s21, 0
        %s203 = scalar_lea.vmem %s3, %s202
      $region24: #{matmul_bn_act.1} parent=11 // pred_fallthru
        _
    $region12: #{matmul_bn_act.1} parent=5 // pred_fallthru
      _
    %p204 = scmp.lt.s32.totalorder %s10, 8
    // Predicated region
    $region25: #{matmul_bn_act.1} parent=5 // pred_check
      %p205 = pneg %p204
    $region26: #{matmul_bn_act.1} parent=5 // pred_check_branch
      %207 = sbr.rel (%p205) target = $region28
    $region27: #{matmul_bn_act.1} parent=5 // pred_region
      // Predicated region
      $region29: #{matmul_bn_act.1} parent=27 // pred_check
        %p208 = pneg %p51
      $region30: #{matmul_bn_act.1} parent=27 // pred_check_branch
        %210 = sbr.rel (%p208) target = $region32
      $region31: #{matmul_bn_act.1} parent=27 // pred_region
        %s211 = smul.u32 32, %s17
        %p212 = scmp.lt.s32.totalorder %s211, 255
        %s213 = scalar_select %p212, %s211, 255
        %p214 = scmp.lt.s32.totalorder %s19, 0
        %s215 = scalar_select %p214, %s19, 0
        %s216 = sadd.s32 %s215, %s213
        %s217 = smul.addr %s216, 4
        %s218 = scalar_lea.vmem %s0, %s217
        %s219 = smul.u32 32, %s17
      $region32: #{matmul_bn_act.1} parent=27 // pred_fallthru
        _
    $region28: #{matmul_bn_act.1} parent=5 // pred_fallthru
      _
    %p220 = scmp.le.s32.totalorder 1, %s10
    %p221 = scmp.lt.s32.totalorder %s10, 9
    %p222 = pnand %p220, %p221
    %p223 = pneg %p222
    // Predicated region
    $region33: #{matmul_bn_act.1} parent=5 // pred_check
      _
    $region34: #{matmul_bn_act.1} parent=5 // pred_check_branch
      %225 = sbr.rel (%p222) target = $region36
    $region35: #{matmul_bn_act.1} parent=5 // pred_region
      %s226 = ssub.s32 %s10, 1
      %s227 = smul.u32 32, %s20
      %p228 = scmp.lt.s32.totalorder %s227, 255
      %s229 = scalar_select %p228, %s227, 255
      %p230 = scmp.lt.s32.totalorder %s22, 0
      %s231 = scalar_select %p230, %s22, 0
      %s232 = sadd.s32 %s231, %s229
      %s233 = smul.addr %s232, 4
      %s234 = scalar_lea.vmem %s0, %s233
      %p235 = pneg %p57
      %p236 = pneg %p54
      %s237 = smul.u32 16, %s22
      %p238 = scmp.lt.s32.totalorder %s237, 15
      %s239 = scalar_select %p238, %s237, 15
      %p240 = scmp.lt.s32.totalorder %s21, 0
      %s241 = scalar_select %p240, %s21, 0
      %s242 = sadd.s32 %s241, %s239
      %s243 = smul.addr %s242, 4
      %s244 = scalar_lea.vmem %s1, %s243
      %p245 = pneg %p85
      %p246 = pneg %p82
      %p247 = scmp.lt.s32.totalorder %s21, 0
      %s248 = scalar_select %p247, %s21, 0
      %s249 = scalar_lea.vmem %s2, %s248
      %p250 = pneg %p111
      %p251 = pneg %p108
      %p252 = scmp.lt.s32.totalorder %s21, 0
      %s253 = scalar_select %p252, %s21, 0
      %s254 = scalar_lea.vmem %s3, %s253
      %p255 = pneg %p137
      %p256 = pneg %p134
      %p257 = pneg %p165
      %p258 = pneg %p162
      %s259 = smul.u32 32, %s20
      %p260 = scmp.lt.s32.totalorder %s259, 255
      %s261 = scalar_select %p260, %s259, 255
      %p262 = scmp.lt.s32.totalorder %s21, 0
      %s263 = scalar_select %p262, %s21, 0
      %s264 = sadd.s32 %s263, %s261
      %s265 = smul.addr %s264, 4
      %s266 = scalar_lea.vmem %s4, %s265
      %s267 = smul.u32 32, %s20
      %p268 = scmp.lt.s32.totalorder %s267, 255
      %s269 = scalar_select %p268, %s267, 255
      %p270 = scmp.lt.s32.totalorder %s22, 0
      %s271 = scalar_select %p270, %s22, 0
      %s272 = sadd.s32 %s271, %s269
      %s273 = smul.addr %s272, 4
      %s274 = scalar_lea.vmem %s0, %s273
      %s275 = smul.u32 32, %s20
      %s276 = smul.u32 16, %s22
      %p277 = scmp.lt.s32.totalorder %s276, 15
      %s278 = scalar_select %p277, %s276, 15
      %p279 = scmp.lt.s32.totalorder %s21, 0
      %s280 = scalar_select %p279, %s21, 0
      %s281 = sadd.s32 %s280, %s278
      %s282 = smul.addr %s281, 4
      %s283 = scalar_lea.vmem %s1, %s282
      %s284 = smul.u32 16, %s22
      %p285 = scmp.lt.s32.totalorder %s21, 0
      %s286 = scalar_select %p285, %s21, 0
      %s287 = scalar_lea.vmem %s2, %s286
      %p288 = scmp.lt.s32.totalorder %s21, 0
      %s289 = scalar_select %p288, %s21, 0
      %s290 = scalar_lea.vmem %s3, %s289
      %s291 = smul.u32 32, %s20
      %p292 = scmp.lt.s32.totalorder %s291, 255
      %s293 = scalar_select %p292, %s291, 255
      %p294 = scmp.lt.s32.totalorder %s21, 0
      %s295 = scalar_select %p294, %s21, 0
      %s296 = sadd.s32 %s295, %s293
      %s297 = smul.addr %s296, 4
      %s298 = scalar_lea.vmem %s4, %s297
      %s299 = smul.u32 32, %s20
      %p301 = scmp.eq.s32.totalorder %s22, 0
      // Predicated region
      $region37: #{matmul_bn_act.1} parent=35 // pred_check
        %p302 = pneg %p301
      $region38: #{matmul_bn_act.1} parent=35 // pred_check_branch
        %304 = sbr.rel (%p302) target = $region40
      $region39: #{matmul_bn_act.1} parent=35 // pred_region
        %305 = vst [vmem:[#allocation2] sm:$0xff] 0.0
        %306 = vst [vmem:[#allocation2 + $0x8] sm:$0xff] 0.0
        %307 = vst [vmem:[#allocation2 + $0x10] sm:$0xff] 0.0
        %308 = vst [vmem:[#allocation2 + $0x18] sm:$0xff] 0.0
        %309 = vst [vmem:[#allocation2 + $0x20] sm:$0xff] 0.0
        %310 = vst [vmem:[#allocation2 + $0x28] sm:$0xff] 0.0
        %311 = vst [vmem:[#allocation2 + $0x30] sm:$0xff] 0.0
        %312 = vst [vmem:[#allocation2 + $0x38] sm:$0xff] 0.0
        %313 = vst [vmem:[#allocation2 + $0x40] sm:$0xff] 0.0
        %314 = vst [vmem:[#allocation2 + $0x48] sm:$0xff] 0.0
        %315 = vst [vmem:[#allocation2 + $0x50] sm:$0xff] 0.0
        %316 = vst [vmem:[#allocation2 + $0x58] sm:$0xff] 0.0
        %317 = vst [vmem:[#allocation2 + $0x60] sm:$0xff] 0.0
        %318 = vst [vmem:[#allocation2 + $0x68] sm:$0xff] 0.0
        %319 = vst [vmem:[#allocation2 + $0x70] sm:$0xff] 0.0
        %320 = vst [vmem:[#allocation2 + $0x78] sm:$0xff] 0.0
        %321 = vst [vmem:[#allocation2 + $0x80] sm:$0xff] 0.0
        %322 = vst [vmem:[#allocation2 + $0x88] sm:$0xff] 0.0
        %323 = vst [vmem:[#allocation2 + $0x90] sm:$0xff] 0.0
        %324 = vst [vmem:[#allocation2 + $0x98] sm:$0xff] 0.0
        %325 = vst [vmem:[#allocation2 + $0xa0] sm:$0xff] 0.0
        %326 = vst [vmem:[#allocation2 + $0xa8] sm:$0xff] 0.0
        %327 = vst [vmem:[#allocation2 + $0xb0] sm:$0xff] 0.0
        %328 = vst [vmem:[#allocation2 + $0xb8] sm:$0xff] 0.0
        %329 = vst [vmem:[#allocation2 + $0xc0] sm:$0xff] 0.0
        %330 = vst [vmem:[#allocation2 + $0xc8] sm:$0xff] 0.0
        %331 = vst [vmem:[#allocation2 + $0xd0] sm:$0xff] 0.0
        %332 = vst [vmem:[#allocation2 + $0xd8] sm:$0xff] 0.0
        %333 = vst [vmem:[#allocation2 + $0xe0] sm:$0xff] 0.0
        %334 = vst [vmem:[#allocation2 + $0xe8] sm:$0xff] 0.0
        %335 = vst [vmem:[#allocation2 + $0xf0] sm:$0xff] 0.0
        %336 = vst [vmem:[#allocation2 + $0xf8] sm:$0xff] 0.0
      $region40: #{matmul_bn_act.1} parent=35 // pred_fallthru
        _
      %v337 = vld [vmem:[#allocation2] sm:$0xff]
      %v338 = vld [vmem:[#allocation2 + $0x8] sm:$0xff]
      %v339 = vld [vmem:[#allocation2 + $0x10] sm:$0xff]
      %v340 = vld [vmem:[#allocation2 + $0x18] sm:$0xff]
      %v341 = vld [vmem:[#allocation2 + $0x20] sm:$0xff]
      %v342 = vld [vmem:[#allocation2 + $0x28] sm:$0xff]
      %v343 = vld [vmem:[#allocation2 + $0x30] sm:$0xff]
      %v344 = vld [vmem:[#allocation2 + $0x38] sm:$0xff]
      %v345 = vld [vmem:[#allocation2 + $0x40] sm:$0xff]
      %v346 = vld [vmem:[#allocation2 + $0x48] sm:$0xff]
      %v347 = vld [vmem:[#allocation2 + $0x50] sm:$0xff]
      %v348 = vld [vmem:[#allocation2 + $0x58] sm:$0xff]
      %v349 = vld [vmem:[#allocation2 + $0x60] sm:$0xff]
      %v350 = vld [vmem:[#allocation2 + $0x68] sm:$0xff]
      %v351 = vld [vmem:[#allocation2 + $0x70] sm:$0xff]
      %v352 = vld [vmem:[#allocation2 + $0x78] sm:$0xff]
      %v353 = vld [vmem:[#allocation2 + $0x80] sm:$0xff]
      %v354 = vld [vmem:[#allocation2 + $0x88] sm:$0xff]
      %v355 = vld [vmem:[#allocation2 + $0x90] sm:$0xff]
      %v356 = vld [vmem:[#allocation2 + $0x98] sm:$0xff]
      %v357 = vld [vmem:[#allocation2 + $0xa0] sm:$0xff]
      %v358 = vld [vmem:[#allocation2 + $0xa8] sm:$0xff]
      %v359 = vld [vmem:[#allocation2 + $0xb0] sm:$0xff]
      %v360 = vld [vmem:[#allocation2 + $0xb8] sm:$0xff]
      %v361 = vld [vmem:[#allocation2 + $0xc0] sm:$0xff]
      %v362 = vld [vmem:[#allocation2 + $0xc8] sm:$0xff]
      %v363 = vld [vmem:[#allocation2 + $0xd0] sm:$0xff]
      %v364 = vld [vmem:[#allocation2 + $0xd8] sm:$0xff]
      %v365 = vld [vmem:[#allocation2 + $0xe0] sm:$0xff]
      %v366 = vld [vmem:[#allocation2 + $0xe8] sm:$0xff]
      %v367 = vld [vmem:[#allocation2 + $0xf0] sm:$0xff]
      %v368 = vld [vmem:[#allocation2 + $0xf8] sm:$0xff]
      %v369 = vld [vmem:[%s274] sm:$0xf]
      %v370 = vld [vmem:[%s274 + $0x4] sm:$0xf]
      %v371 = vld [vmem:[%s274 + $0x8] sm:$0xf]
      %v372 = vld [vmem:[%s274 + $0xc] sm:$0xf]
      %v373 = vld [vmem:[%s274 + $0x10] sm:$0xf]
      %v374 = vld [vmem:[%s274 + $0x14] sm:$0xf]
      %v375 = vld [vmem:[%s274 + $0x18] sm:$0xf]
      %v376 = vld [vmem:[%s274 + $0x1c] sm:$0xf]
      %v377 = vld [vmem:[%s274 + $0x20] sm:$0xf]
      %v378 = vld [vmem:[%s274 + $0x24] sm:$0xf]
      %v379 = vld [vmem:[%s274 + $0x28] sm:$0xf]
      %v380 = vld [vmem:[%s274 + $0x2c] sm:$0xf]
      %v381 = vld [vmem:[%s274 + $0x30] sm:$0xf]
      %v382 = vld [vmem:[%s274 + $0x34] sm:$0xf]
      %v383 = vld [vmem:[%s274 + $0x38] sm:$0xf]
      %v384 = vld [vmem:[%s274 + $0x3c] sm:$0xf]
      %v385 = vld [vmem:[%s274 + $0x40] sm:$0xf]
      %v386 = vld [vmem:[%s274 + $0x44] sm:$0xf]
      %v387 = vld [vmem:[%s274 + $0x48] sm:$0xf]
      %v388 = vld [vmem:[%s274 + $0x4c] sm:$0xf]
      %v389 = vld [vmem:[%s274 + $0x50] sm:$0xf]
      %v390 = vld [vmem:[%s274 + $0x54] sm:$0xf]
      %v391 = vld [vmem:[%s274 + $0x58] sm:$0xf]
      %v392 = vld [vmem:[%s274 + $0x5c] sm:$0xf]
      %v393 = vld [vmem:[%s274 + $0x60] sm:$0xf]
      %v394 = vld [vmem:[%s274 + $0x64] sm:$0xf]
      %v395 = vld [vmem:[%s274 + $0x68] sm:$0xf]
      %v396 = vld [vmem:[%s274 + $0x6c] sm:$0xf]
      %v397 = vld [vmem:[%s274 + $0x70] sm:$0xf]
      %v398 = vld [vmem:[%s274 + $0x74] sm:$0xf]
      %v399 = vld [vmem:[%s274 + $0x78] sm:$0xf]
      %v400 = vld [vmem:[%s274 + $0x7c] sm:$0xf]
      %v401 = vld [vmem:[%s283] sm:$0xf]
      %v402 = vld [vmem:[%s283 + $0x4] sm:$0xf]
      %v403 = vld [vmem:[%s283 + $0x8] sm:$0xf]
      %v404 = vld [vmem:[%s283 + $0xc] sm:$0xf]
      %v405 = vld [vmem:[%s283 + $0x10] sm:$0xf]
      %v406 = vld [vmem:[%s283 + $0x14] sm:$0xf]
      %v407 = vld [vmem:[%s283 + $0x18] sm:$0xf]
      %v408 = vld [vmem:[%s283 + $0x1c] sm:$0xf]
      %v409 = vld [vmem:[%s283 + $0x20] sm:$0xf]
      %v410 = vld [vmem:[%s283 + $0x24] sm:$0xf]
      %v411 = vld [vmem:[%s283 + $0x28] sm:$0xf]
      %v412 = vld [vmem:[%s283 + $0x2c] sm:$0xf]
      %v413 = vld [vmem:[%s283 + $0x30] sm:$0xf]
      %v414 = vld [vmem:[%s283 + $0x34] sm:$0xf]
      %v415 = vld [vmem:[%s283 + $0x38] sm:$0xf]
      %v416 = vld [vmem:[%s283 + $0x3c] sm:$0xf]
      %v449 = vunpack.c.l.b16 %v369
      %v450 = vunpack.c.l.b16 %v370
      %v451 = vunpack.c.l.b16 %v371
      %v452 = vunpack.c.l.b16 %v372
      %v453 = vunpack.c.l.b16 %v373
      %v454 = vunpack.c.l.b16 %v374
      %v455 = vunpack.c.l.b16 %v375
      %v456 = vunpack.c.l.b16 %v376
      %v457 = vunpack.c.l.b16 %v377
      %v458 = vunpack.c.l.b16 %v378
      %v459 = vunpack.c.l.b16 %v379
      %v460 = vunpack.c.l.b16 %v380
      %v461 = vunpack.c.l.b16 %v381
      %v462 = vunpack.c.l.b16 %v382
      %v463 = vunpack.c.l.b16 %v383
      %v464 = vunpack.c.l.b16 %v384
      %v465 = vunpack.c.l.b16 %v385
      %v466 = vunpack.c.l.b16 %v386
      %v467 = vunpack.c.l.b16 %v387
      %v468 = vunpack.c.l.b16 %v388
      %v469 = vunpack.c.l.b16 %v389
      %v470 = vunpack.c.l.b16 %v390
      %v471 = vunpack.c.l.b16 %v391
      %v472 = vunpack.c.l.b16 %v392
      %v473 = vunpack.c.l.b16 %v393
      %v474 = vunpack.c.l.b16 %v394
      %v475 = vunpack.c.l.b16 %v395
      %v476 = vunpack.c.l.b16 %v396
      %v477 = vunpack.c.l.b16 %v397
      %v478 = vunpack.c.l.b16 %v398
      %v479 = vunpack.c.l.b16 %v399
      %v480 = vunpack.c.l.b16 %v400
      %v481 = vpack.c.b16 %v450, %v449
      %v482 = vpack.c.b16 %v452, %v451
      %v483 = vpack.c.b16 %v454, %v453
      %v484 = vpack.c.b16 %v456, %v455
      %v485 = vpack.c.b16 %v458, %v457
      %v486 = vpack.c.b16 %v460, %v459
      %v487 = vpack.c.b16 %v462, %v461
      %v488 = vpack.c.b16 %v464, %v463
      %v489 = vpack.c.b16 %v466, %v465
      %v490 = vpack.c.b16 %v468, %v467
      %v491 = vpack.c.b16 %v470, %v469
      %v492 = vpack.c.b16 %v472, %v471
      %v493 = vpack.c.b16 %v474, %v473
      %v494 = vpack.c.b16 %v476, %v475
      %v495 = vpack.c.b16 %v478, %v477
      %v496 = vpack.c.b16 %v480, %v479
      %v529 = vunpack.c.l.b16 %v401
      %v530 = vunpack.c.l.b16 %v402
      %v531 = vunpack.c.l.b16 %v403
      %v532 = vunpack.c.l.b16 %v404
      %v533 = vunpack.c.l.b16 %v405
      %v534 = vunpack.c.l.b16 %v406
      %v535 = vunpack.c.l.b16 %v407
      %v536 = vunpack.c.l.b16 %v408
      %v537 = vunpack.c.l.b16 %v409
      %v538 = vunpack.c.l.b16 %v410
      %v539 = vunpack.c.l.b16 %v411
      %v540 = vunpack.c.l.b16 %v412
      %v541 = vunpack.c.l.b16 %v413
      %v542 = vunpack.c.l.b16 %v414
      %v543 = vunpack.c.l.b16 %v415
      %v544 = vunpack.c.l.b16 %v416
      %v545 = vpack.c.b16 %v530, %v529
      %v546 = vpack.c.b16 %v532, %v531
      %v547 = vpack.c.b16 %v534, %v533
      %v548 = vpack.c.b16 %v536, %v535
      %v549 = vpack.c.b16 %v538, %v537
      %v550 = vpack.c.b16 %v540, %v539
      %v551 = vpack.c.b16 %v542, %v541
      %v552 = vpack.c.b16 %v544, %v543
      %561 = vmatprep.subr.bf16.mxu0 0
      %562 = vmatpush1.bf16.msra.mxu0 %v545
      %563 = vmatprep.subr.bf16.mxu0 0
      %564 = vmatpush1.bf16.msra.mxu0 %v546
      %565 = vmatprep.subr.bf16.mxu0 0
      %566 = vmatpush1.bf16.msra.mxu0 %v547
      %567 = vmatprep.subr.bf16.mxu0 0
      %568 = vmatpush1.bf16.msra.mxu0 %v548
      %569 = vmatprep.subr.bf16.mxu0 0
      %570 = vmatpush1.bf16.msra.mxu0 %v549
      %571 = vmatprep.subr.bf16.mxu0 0
      %572 = vmatpush1.bf16.msra.mxu0 %v550
      %573 = vmatprep.subr.bf16.mxu0 0
      %574 = vmatpush1.bf16.msra.mxu0 %v551
      %575 = vmatprep.subr.bf16.mxu0 0
      %576 = vmatpush1.bf16.msra.mxu0 %v552
      %577 = vmatprep.subr.bf16.mxu0 0
      %578 = vmatpush1.bf16.msra.mxu0 0
      %579 = vmatprep.subr.bf16.mxu0 0
      %580 = vmatpush1.bf16.msra.mxu0 0
      %581 = vmatprep.subr.bf16.mxu0 0
      %582 = vmatpush1.bf16.msra.mxu0 0
      %583 = vmatprep.subr.bf16.mxu0 0
      %584 = vmatpush1.bf16.msra.mxu0 0
      %585 = vmatprep.subr.bf16.mxu0 0
      %586 = vmatpush1.bf16.msra.mxu0 0
      %587 = vmatprep.subr.bf16.mxu0 0
      %588 = vmatpush1.bf16.msra.mxu0 0
      %589 = vmatprep.subr.bf16.mxu0 0
      %590 = vmatpush1.bf16.msra.mxu0 0
      %591 = vmatprep.subr.bf16.mxu0 0
      %592 = vmatpush1.bf16.msra.mxu0 0
      %593 = vmatprep.mubr.bf16.mxu0 0
      %594 = vmatmul.mubr.bf16.gmra.mrb[0].mxu0 %v481
      %v595 = vpop.f32.mrb[0].mxu0
      %v596 = vadd.f32 0.0, %v595
      %v597 = vpop.f32.mrb[0].mxu0
      %v598 = vpop.f32.mrb[0].mxu0
      %v599 = vadd.f32 0.0, %v598
      %v600 = vpop.f32.mrb[0].mxu0
      %601 = vmatprep.mubr.bf16.mxu0 0
      %602 = vmatmul.mubr.bf16.gmra.mrb[0].mxu0 %v482
      %v603 = vpop.f32.mrb[0].mxu0
      %v604 = vadd.f32 0.0, %v603
      %v605 = vpop.f32.mrb[0].mxu0
      %v606 = vpop.f32.mrb[0].mxu0
      %v607 = vadd.f32 0.0, %v606
      %v608 = vpop.f32.mrb[0].mxu0
      %609 = vmatprep.mubr.bf16.mxu0 0
      %610 = vmatmul.mubr.bf16.gmra.mrb[0].mxu0 %v483
      %v611 = vpop.f32.mrb[0].mxu0
      %v612 = vadd.f32 0.0, %v611
      %v613 = vpop.f32.mrb[0].mxu0
      %v614 = vpop.f32.mrb[0].mxu0
      %v615 = vadd.f32 0.0, %v614
      %v616 = vpop.f32.mrb[0].mxu0
      %617 = vmatprep.mubr.bf16.mxu0 0
      %618 = vmatmul.mubr.bf16.gmra.mrb[0].mxu0 %v484
      %v619 = vpop.f32.mrb[0].mxu0
      %v620 = vadd.f32 0.0, %v619
      %v621 = vpop.f32.mrb[0].mxu0
      %v622 = vpop.f32.mrb[0].mxu0
      %v623 = vadd.f32 0.0, %v622
      %v624 = vpop.f32.mrb[0].mxu0
      %625 = vmatprep.mubr.bf16.mxu0 0
      %626 = vmatmul.mubr.bf16.gmra.mrb[0].mxu0 %v485
      %v627 = vpop.f32.mrb[0].mxu0
      %v628 = vadd.f32 0.0, %v627
      %v629 = vpop.f32.mrb[0].mxu0
      %v630 = vpop.f32.mrb[0].mxu0
      %v631 = vadd.f32 0.0, %v630
      %v632 = vpop.f32.mrb[0].mxu0
      %633 = vmatprep.mubr.bf16.mxu0 0
      %634 = vmatmul.mubr.bf16.gmra.mrb[0].mxu0 %v486
      %v635 = vpop.f32.mrb[0].mxu0
      %v636 = vadd.f32 0.0, %v635
      %v637 = vpop.f32.mrb[0].mxu0
      %v638 = vpop.f32.mrb[0].mxu0
      %v639 = vadd.f32 0.0, %v638
      %v640 = vpop.f32.mrb[0].mxu0
      %641 = vmatprep.mubr.bf16.mxu0 0
      %642 = vmatmul.mubr.bf16.gmra.mrb[0].mxu0 %v487
      %v643 = vpop.f32.mrb[0].mxu0
      %v644 = vadd.f32 0.0, %v643
      %v645 = vpop.f32.mrb[0].mxu0
      %v646 = vpop.f32.mrb[0].mxu0
      %v647 = vadd.f32 0.0, %v646
      %v648 = vpop.f32.mrb[0].mxu0
      %649 = vmatprep.mubr.bf16.mxu0 0
      %650 = vmatmul.mubr.bf16.gmra.mrb[0].mxu0 %v488
      %v651 = vpop.f32.mrb[0].mxu0
      %v652 = vadd.f32 0.0, %v651
      %v653 = vpop.f32.mrb[0].mxu0
      %v654 = vpop.f32.mrb[0].mxu0
      %v655 = vadd.f32 0.0, %v654
      %v656 = vpop.f32.mrb[0].mxu0
      %657 = vmatprep.mubr.bf16.mxu0 0
      %658 = vmatmul.mubr.bf16.gmra.mrb[0].mxu0 %v489
      %v659 = vpop.f32.mrb[0].mxu0
      %v660 = vadd.f32 0.0, %v659
      %v661 = vpop.f32.mrb[0].mxu0
      %v662 = vpop.f32.mrb[0].mxu0
      %v663 = vadd.f32 0.0, %v662
      %v664 = vpop.f32.mrb[0].mxu0
      %665 = vmatprep.mubr.bf16.mxu0 0
      %666 = vmatmul.mubr.bf16.gmra.mrb[0].mxu0 %v490
      %v667 = vpop.f32.mrb[0].mxu0
      %v668 = vadd.f32 0.0, %v667
      %v669 = vpop.f32.mrb[0].mxu0
      %v670 = vpop.f32.mrb[0].mxu0
      %v671 = vadd.f32 0.0, %v670
      %v672 = vpop.f32.mrb[0].mxu0
      %673 = vmatprep.mubr.bf16.mxu0 0
      %674 = vmatmul.mubr.bf16.gmra.mrb[0].mxu0 %v491
      %v675 = vpop.f32.mrb[0].mxu0
      %v676 = vadd.f32 0.0, %v675
      %v677 = vpop.f32.mrb[0].mxu0
      %v678 = vpop.f32.mrb[0].mxu0
      %v679 = vadd.f32 0.0, %v678
      %v680 = vpop.f32.mrb[0].mxu0
      %681 = vmatprep.mubr.bf16.mxu0 0
      %682 = vmatmul.mubr.bf16.gmra.mrb[0].mxu0 %v492
      %v683 = vpop.f32.mrb[0].mxu0
      %v684 = vadd.f32 0.0, %v683
      %v685 = vpop.f32.mrb[0].mxu0
      %v686 = vpop.f32.mrb[0].mxu0
      %v687 = vadd.f32 0.0, %v686
      %v688 = vpop.f32.mrb[0].mxu0
      %689 = vmatprep.mubr.bf16.mxu0 0
      %690 = vmatmul.mubr.bf16.gmra.mrb[0].mxu0 %v493
      %v691 = vpop.f32.mrb[0].mxu0
      %v692 = vadd.f32 0.0, %v691
      %v693 = vpop.f32.mrb[0].mxu0
      %v694 = vpop.f32.mrb[0].mxu0
      %v695 = vadd.f32 0.0, %v694
      %v696 = vpop.f32.mrb[0].mxu0
      %697 = vmatprep.mubr.bf16.mxu0 0
      %698 = vmatmul.mubr.bf16.gmra.mrb[0].mxu0 %v494
      %v699 = vpop.f32.mrb[0].mxu0
      %v700 = vadd.f32 0.0, %v699
      %v701 = vpop.f32.mrb[0].mxu0
      %v702 = vpop.f32.mrb[0].mxu0
      %v703 = vadd.f32 0.0, %v702
      %v704 = vpop.f32.mrb[0].mxu0
      %705 = vmatprep.mubr.bf16.mxu0 0
      %706 = vmatmul.mubr.bf16.gmra.mrb[0].mxu0 %v495
      %v707 = vpop.f32.mrb[0].mxu0
      %v708 = vadd.f32 0.0, %v707
      %v709 = vpop.f32.mrb[0].mxu0
      %v710 = vpop.f32.mrb[0].mxu0
      %v711 = vadd.f32 0.0, %v710
      %v712 = vpop.f32.mrb[0].mxu0
      %713 = vmatprep.mubr.bf16.mxu0 0
      %714 = vmatmul.mubr.bf16.gmra.mrb[0].mxu0 %v496
      %v715 = vpop.f32.mrb[0].mxu0
      %v716 = vadd.f32 0.0, %v715
      %v717 = vpop.f32.mrb[0].mxu0
      %v718 = vpop.f32.mrb[0].mxu0
      %v719 = vadd.f32 0.0, %v718
      %v720 = vpop.f32.mrb[0].mxu0
      %721 = vdwg.mxu0
      %v722 = vadd.f32 %v337, %v596
      %v723 = vadd.f32 %v338, %v599
      %v724 = vadd.f32 %v339, %v604
      %v725 = vadd.f32 %v340, %v607
      %v726 = vadd.f32 %v341, %v612
      %v727 = vadd.f32 %v342, %v615
      %v728 = vadd.f32 %v343, %v620
      %v729 = vadd.f32 %v344, %v623
      %v730 = vadd.f32 %v345, %v628
      %v731 = vadd.f32 %v346, %v631
      %v732 = vadd.f32 %v347, %v636
      %v733 = vadd.f32 %v348, %v639
      %v734 = vadd.f32 %v349, %v644
      %v735 = vadd.f32 %v350, %v647
      %v736 = vadd.f32 %v351, %v652
      %v737 = vadd.f32 %v352, %v655
      %v738 = vadd.f32 %v353, %v660
      %v739 = vadd.f32 %v354, %v663
      %v740 = vadd.f32 %v355, %v668
      %v741 = vadd.f32 %v356, %v671
      %v742 = vadd.f32 %v357, %v676
      %v743 = vadd.f32 %v358, %v679
      %v744 = vadd.f32 %v359, %v684
      %v745 = vadd.f32 %v360, %v687
      %v746 = vadd.f32 %v361, %v692
      %v747 = vadd.f32 %v362, %v695
      %v748 = vadd.f32 %v363, %v700
      %v749 = vadd.f32 %v364, %v703
      %v750 = vadd.f32 %v365, %v708
      %v751 = vadd.f32 %v366, %v711
      %v752 = vadd.f32 %v367, %v716
      %v753 = vadd.f32 %v368, %v719
      %754 = vst [vmem:[#allocation2] sm:$0xff] %v722
      %755 = vst [vmem:[#allocation2 + $0x8] sm:$0xff] %v723
      %756 = vst [vmem:[#allocation2 + $0x10] sm:$0xff] %v724
      %757 = vst [vmem:[#allocation2 + $0x18] sm:$0xff] %v725
      %758 = vst [vmem:[#allocation2 + $0x20] sm:$0xff] %v726
      %759 = vst [vmem:[#allocation2 + $0x28] sm:$0xff] %v727
      %760 = vst [vmem:[#allocation2 + $0x30] sm:$0xff] %v728
      %761 = vst [vmem:[#allocation2 + $0x38] sm:$0xff] %v729
      %762 = vst [vmem:[#allocation2 + $0x40] sm:$0xff] %v730
      %763 = vst [vmem:[#allocation2 + $0x48] sm:$0xff] %v731
      %764 = vst [vmem:[#allocation2 + $0x50] sm:$0xff] %v732
      %765 = vst [vmem:[#allocation2 + $0x58] sm:$0xff] %v733
      %766 = vst [vmem:[#allocation2 + $0x60] sm:$0xff] %v734
      %767 = vst [vmem:[#allocation2 + $0x68] sm:$0xff] %v735
      %768 = vst [vmem:[#allocation2 + $0x70] sm:$0xff] %v736
      %769 = vst [vmem:[#allocation2 + $0x78] sm:$0xff] %v737
      %770 = vst [vmem:[#allocation2 + $0x80] sm:$0xff] %v738
      %771 = vst [vmem:[#allocation2 + $0x88] sm:$0xff] %v739
      %772 = vst [vmem:[#allocation2 + $0x90] sm:$0xff] %v740
      %773 = vst [vmem:[#allocation2 + $0x98] sm:$0xff] %v741
      %774 = vst [vmem:[#allocation2 + $0xa0] sm:$0xff] %v742
      %775 = vst [vmem:[#allocation2 + $0xa8] sm:$0xff] %v743
      %776 = vst [vmem:[#allocation2 + $0xb0] sm:$0xff] %v744
      %777 = vst [vmem:[#allocation2 + $0xb8] sm:$0xff] %v745
      %778 = vst [vmem:[#allocation2 + $0xc0] sm:$0xff] %v746
      %779 = vst [vmem:[#allocation2 + $0xc8] sm:$0xff] %v747
      %780 = vst [vmem:[#allocation2 + $0xd0] sm:$0xff] %v748
      %781 = vst [vmem:[#allocation2 + $0xd8] sm:$0xff] %v749
      %782 = vst [vmem:[#allocation2 + $0xe0] sm:$0xff] %v750
      %783 = vst [vmem:[#allocation2 + $0xe8] sm:$0xff] %v751
      %784 = vst [vmem:[#allocation2 + $0xf0] sm:$0xff] %v752
      %785 = vst [vmem:[#allocation2 + $0xf8] sm:$0xff] %v753
      // Predicated region
      $region41: #{matmul_bn_act.1} parent=35 // pred_check
        %p786 = pneg %p301
      $region42: #{matmul_bn_act.1} parent=35 // pred_check_branch
        %788 = sbr.rel (%p786) target = $region44
      $region43: #{matmul_bn_act.1} parent=35 // pred_region
        %v789 = vld [vmem:[#allocation2] sm:$0xff]
        %v790 = vld [vmem:[#allocation2 + $0x8] sm:$0xff]
        %v791 = vld [vmem:[#allocation2 + $0x10] sm:$0xff]
        %v792 = vld [vmem:[#allocation2 + $0x18] sm:$0xff]
        %v793 = vld [vmem:[#allocation2 + $0x20] sm:$0xff]
        %v794 = vld [vmem:[#allocation2 + $0x28] sm:$0xff]
        %v795 = vld [vmem:[#allocation2 + $0x30] sm:$0xff]
        %v796 = vld [vmem:[#allocation2 + $0x38] sm:$0xff]
        %v797 = vld [vmem:[#allocation2 + $0x40] sm:$0xff]
        %v798 = vld [vmem:[#allocation2 + $0x48] sm:$0xff]
        %v799 = vld [vmem:[#allocation2 + $0x50] sm:$0xff]
        %v800 = vld [vmem:[#allocation2 + $0x58] sm:$0xff]
        %v801 = vld [vmem:[#allocation2 + $0x60] sm:$0xff]
        %v802 = vld [vmem:[#allocation2 + $0x68] sm:$0xff]
        %v803 = vld [vmem:[#allocation2 + $0x70] sm:$0xff]
        %v804 = vld [vmem:[#allocation2 + $0x78] sm:$0xff]
        %v805 = vld [vmem:[#allocation2 + $0x80] sm:$0xff]
        %v806 = vld [vmem:[#allocation2 + $0x88] sm:$0xff]
        %v807 = vld [vmem:[#allocation2 + $0x90] sm:$0xff]
        %v808 = vld [vmem:[#allocation2 + $0x98] sm:$0xff]
        %v809 = vld [vmem:[#allocation2 + $0xa0] sm:$0xff]
        %v810 = vld [vmem:[#allocation2 + $0xa8] sm:$0xff]
        %v811 = vld [vmem:[#allocation2 + $0xb0] sm:$0xff]
        %v812 = vld [vmem:[#allocation2 + $0xb8] sm:$0xff]
        %v813 = vld [vmem:[#allocation2 + $0xc0] sm:$0xff]
        %v814 = vld [vmem:[#allocation2 + $0xc8] sm:$0xff]
        %v815 = vld [vmem:[#allocation2 + $0xd0] sm:$0xff]
        %v816 = vld [vmem:[#allocation2 + $0xd8] sm:$0xff]
        %v817 = vld [vmem:[#allocation2 + $0xe0] sm:$0xff]
        %v818 = vld [vmem:[#allocation2 + $0xe8] sm:$0xff]
        %v819 = vld [vmem:[#allocation2 + $0xf0] sm:$0xff]
        %v820 = vld [vmem:[#allocation2 + $0xf8] sm:$0xff]
        %v821 = vld [vmem:[%s287] sm:$0x1]
        %v823 = vlaneseq
        %v824 = vshrl.u32 %v823, 7
        %v825 = vsub.s32 0, %v824
        %v826 = vrot.slane %v821, %v825
        %v828 = vmul.f32 %v789, %v826
        %v829 = vmul.f32 %v790, %v826
        %v830 = vmul.f32 %v791, %v826
        %v831 = vmul.f32 %v792, %v826
        %v832 = vmul.f32 %v793, %v826
        %v833 = vmul.f32 %v794, %v826
        %v834 = vmul.f32 %v795, %v826
        %v835 = vmul.f32 %v796, %v826
        %v836 = vmul.f32 %v797, %v826
        %v837 = vmul.f32 %v798, %v826
        %v838 = vmul.f32 %v799, %v826
        %v839 = vmul.f32 %v800, %v826
        %v840 = vmul.f32 %v801, %v826
        %v841 = vmul.f32 %v802, %v826
        %v842 = vmul.f32 %v803, %v826
        %v843 = vmul.f32 %v804, %v826
        %v844 = vmul.f32 %v805, %v826
        %v845 = vmul.f32 %v806, %v826
        %v846 = vmul.f32 %v807, %v826
        %v847 = vmul.f32 %v808, %v826
        %v848 = vmul.f32 %v809, %v826
        %v849 = vmul.f32 %v810, %v826
        %v850 = vmul.f32 %v811, %v826
        %v851 = vmul.f32 %v812, %v826
        %v852 = vmul.f32 %v813, %v826
        %v853 = vmul.f32 %v814, %v826
        %v854 = vmul.f32 %v815, %v826
        %v855 = vmul.f32 %v816, %v826
        %v856 = vmul.f32 %v817, %v826
        %v857 = vmul.f32 %v818, %v826
        %v858 = vmul.f32 %v819, %v826
        %v859 = vmul.f32 %v820, %v826
        %v860 = vld [vmem:[%s290] sm:$0x1]
        %v862 = vlaneseq
        %v863 = vshrl.u32 %v862, 7
        %v864 = vsub.s32 0, %v863
        %v865 = vrot.slane %v860, %v864
        %v867 = vadd.f32 %v828, %v865
        %v868 = vadd.f32 %v829, %v865
        %v869 = vadd.f32 %v830, %v865
        %v870 = vadd.f32 %v831, %v865
        %v871 = vadd.f32 %v832, %v865
        %v872 = vadd.f32 %v833, %v865
        %v873 = vadd.f32 %v834, %v865
        %v874 = vadd.f32 %v835, %v865
        %v875 = vadd.f32 %v836, %v865
        %v876 = vadd.f32 %v837, %v865
        %v877 = vadd.f32 %v838, %v865
        %v878 = vadd.f32 %v839, %v865
        %v879 = vadd.f32 %v840, %v865
        %v880 = vadd.f32 %v841, %v865
        %v881 = vadd.f32 %v842, %v865
        %v882 = vadd.f32 %v843, %v865
        %v883 = vadd.f32 %v844, %v865
        %v884 = vadd.f32 %v845, %v865
        %v885 = vadd.f32 %v846, %v865
        %v886 = vadd.f32 %v847, %v865
        %v887 = vadd.f32 %v848, %v865
        %v888 = vadd.f32 %v849, %v865
        %v889 = vadd.f32 %v850, %v865
        %v890 = vadd.f32 %v851, %v865
        %v891 = vadd.f32 %v852, %v865
        %v892 = vadd.f32 %v853, %v865
        %v893 = vadd.f32 %v854, %v865
        %v894 = vadd.f32 %v855, %v865
        %v895 = vadd.f32 %v856, %v865
        %v896 = vadd.f32 %v857, %v865
        %v897 = vadd.f32 %v858, %v865
        %v898 = vadd.f32 %v859, %v865
        %v899 = vmax.f32 %v867, 0.0
        %v900 = vmax.f32 %v868, 0.0
        %v901 = vmax.f32 %v869, 0.0
        %v902 = vmax.f32 %v870, 0.0
        %v903 = vmax.f32 %v871, 0.0
        %v904 = vmax.f32 %v872, 0.0
        %v905 = vmax.f32 %v873, 0.0
        %v906 = vmax.f32 %v874, 0.0
        %v907 = vmax.f32 %v875, 0.0
        %v908 = vmax.f32 %v876, 0.0
        %v909 = vmax.f32 %v877, 0.0
        %v910 = vmax.f32 %v878, 0.0
        %v911 = vmax.f32 %v879, 0.0
        %v912 = vmax.f32 %v880, 0.0
        %v913 = vmax.f32 %v881, 0.0
        %v914 = vmax.f32 %v882, 0.0
        %v915 = vmax.f32 %v883, 0.0
        %v916 = vmax.f32 %v884, 0.0
        %v917 = vmax.f32 %v885, 0.0
        %v918 = vmax.f32 %v886, 0.0
        %v919 = vmax.f32 %v887, 0.0
        %v920 = vmax.f32 %v888, 0.0
        %v921 = vmax.f32 %v889, 0.0
        %v922 = vmax.f32 %v890, 0.0
        %v923 = vmax.f32 %v891, 0.0
        %v924 = vmax.f32 %v892, 0.0
        %v925 = vmax.f32 %v893, 0.0
        %v926 = vmax.f32 %v894, 0.0
        %v927 = vmax.f32 %v895, 0.0
        %v928 = vmax.f32 %v896, 0.0
        %v929 = vmax.f32 %v897, 0.0
        %v930 = vmax.f32 %v898, 0.0
        %v931 = vpack.c.bf16 %v900, %v899
        %v932 = vpack.c.bf16 %v902, %v901
        %v933 = vpack.c.bf16 %v904, %v903
        %v934 = vpack.c.bf16 %v906, %v905
        %v935 = vpack.c.bf16 %v908, %v907
        %v936 = vpack.c.bf16 %v910, %v909
        %v937 = vpack.c.bf16 %v912, %v911
        %v938 = vpack.c.bf16 %v914, %v913
        %v939 = vpack.c.bf16 %v916, %v915
        %v940 = vpack.c.bf16 %v918, %v917
        %v941 = vpack.c.bf16 %v920, %v919
        %v942 = vpack.c.bf16 %v922, %v921
        %v943 = vpack.c.bf16 %v924, %v923
        %v944 = vpack.c.bf16 %v926, %v925
        %v945 = vpack.c.bf16 %v928, %v927
        %v946 = vpack.c.bf16 %v930, %v929
        %v963 = vunpack.c.l.b16 %v931
        %v964 = vunpack.c.h.b16 %v931
        %v965 = vunpack.c.l.b16 %v932
        %v966 = vunpack.c.h.b16 %v932
        %v967 = vunpack.c.l.b16 %v933
        %v968 = vunpack.c.h.b16 %v933
        %v969 = vunpack.c.l.b16 %v934
        %v970 = vunpack.c.h.b16 %v934
        %v971 = vunpack.c.l.b16 %v935
        %v972 = vunpack.c.h.b16 %v935
        %v973 = vunpack.c.l.b16 %v936
        %v974 = vunpack.c.h.b16 %v936
        %v975 = vunpack.c.l.b16 %v937
        %v976 = vunpack.c.h.b16 %v937
        %v977 = vunpack.c.l.b16 %v938
        %v978 = vunpack.c.h.b16 %v938
        %v979 = vunpack.c.l.b16 %v939
        %v980 = vunpack.c.h.b16 %v939
        %v981 = vunpack.c.l.b16 %v940
        %v982 = vunpack.c.h.b16 %v940
        %v983 = vunpack.c.l.b16 %v941
        %v984 = vunpack.c.h.b16 %v941
        %v985 = vunpack.c.l.b16 %v942
        %v986 = vunpack.c.h.b16 %v942
        %v987 = vunpack.c.l.b16 %v943
        %v988 = vunpack.c.h.b16 %v943
        %v989 = vunpack.c.l.b16 %v944
        %v990 = vunpack.c.h.b16 %v944
        %v991 = vunpack.c.l.b16 %v945
        %v992 = vunpack.c.h.b16 %v945
        %v993 = vunpack.c.l.b16 %v946
        %v994 = vunpack.c.h.b16 %v946
        %v995 = vpack.c.b16 %v963, %v963
        %v996 = vpack.c.b16 %v964, %v964
        %v997 = vpack.c.b16 %v965, %v965
        %v998 = vpack.c.b16 %v966, %v966
        %v999 = vpack.c.b16 %v967, %v967
        %v1000 = vpack.c.b16 %v968, %v968
        %v1001 = vpack.c.b16 %v969, %v969
        %v1002 = vpack.c.b16 %v970, %v970
        %v1003 = vpack.c.b16 %v971, %v971
        %v1004 = vpack.c.b16 %v972, %v972
        %v1005 = vpack.c.b16 %v973, %v973
        %v1006 = vpack.c.b16 %v974, %v974
        %v1007 = vpack.c.b16 %v975, %v975
        %v1008 = vpack.c.b16 %v976, %v976
        %v1009 = vpack.c.b16 %v977, %v977
        %v1010 = vpack.c.b16 %v978, %v978
        %v1011 = vpack.c.b16 %v979, %v979
        %v1012 = vpack.c.b16 %v980, %v980
        %v1013 = vpack.c.b16 %v981, %v981
        %v1014 = vpack.c.b16 %v982, %v982
        %v1015 = vpack.c.b16 %v983, %v983
        %v1016 = vpack.c.b16 %v984, %v984
        %v1017 = vpack.c.b16 %v985, %v985
        %v1018 = vpack.c.b16 %v986, %v986
        %v1019 = vpack.c.b16 %v987, %v987
        %v1020 = vpack.c.b16 %v988, %v988
        %v1021 = vpack.c.b16 %v989, %v989
        %v1022 = vpack.c.b16 %v990, %v990
        %v1023 = vpack.c.b16 %v991, %v991
        %v1024 = vpack.c.b16 %v992, %v992
        %v1025 = vpack.c.b16 %v993, %v993
        %v1026 = vpack.c.b16 %v994, %v994
        %1059 = vst [vmem:[%s298] sm:$0xf] %v995
        %1060 = vst [vmem:[%s298 + $0x4] sm:$0xf] %v996
        %1061 = vst [vmem:[%s298 + $0x8] sm:$0xf] %v997
        %1062 = vst [vmem:[%s298 + $0xc] sm:$0xf] %v998
        %1063 = vst [vmem:[%s298 + $0x10] sm:$0xf] %v999
        %1064 = vst [vmem:[%s298 + $0x14] sm:$0xf] %v1000
        %1065 = vst [vmem:[%s298 + $0x18] sm:$0xf] %v1001
        %1066 = vst [vmem:[%s298 + $0x1c] sm:$0xf] %v1002
        %1067 = vst [vmem:[%s298 + $0x20] sm:$0xf] %v1003
        %1068 = vst [vmem:[%s298 + $0x24] sm:$0xf] %v1004
        %1069 = vst [vmem:[%s298 + $0x28] sm:$0xf] %v1005
        %1070 = vst [vmem:[%s298 + $0x2c] sm:$0xf] %v1006
        %1071 = vst [vmem:[%s298 + $0x30] sm:$0xf] %v1007
        %1072 = vst [vmem:[%s298 + $0x34] sm:$0xf] %v1008
        %1073 = vst [vmem:[%s298 + $0x38] sm:$0xf] %v1009
        %1074 = vst [vmem:[%s298 + $0x3c] sm:$0xf] %v1010
        %1075 = vst [vmem:[%s298 + $0x40] sm:$0xf] %v1011
        %1076 = vst [vmem:[%s298 + $0x44] sm:$0xf] %v1012
        %1077 = vst [vmem:[%s298 + $0x48] sm:$0xf] %v1013
        %1078 = vst [vmem:[%s298 + $0x4c] sm:$0xf] %v1014
        %1079 = vst [vmem:[%s298 + $0x50] sm:$0xf] %v1015
        %1080 = vst [vmem:[%s298 + $0x54] sm:$0xf] %v1016
        %1081 = vst [vmem:[%s298 + $0x58] sm:$0xf] %v1017
        %1082 = vst [vmem:[%s298 + $0x5c] sm:$0xf] %v1018
        %1083 = vst [vmem:[%s298 + $0x60] sm:$0xf] %v1019
        %1084 = vst [vmem:[%s298 + $0x64] sm:$0xf] %v1020
        %1085 = vst [vmem:[%s298 + $0x68] sm:$0xf] %v1021
        %1086 = vst [vmem:[%s298 + $0x6c] sm:$0xf] %v1022
        %1087 = vst [vmem:[%s298 + $0x70] sm:$0xf] %v1023
        %1088 = vst [vmem:[%s298 + $0x74] sm:$0xf] %v1024
        %1089 = vst [vmem:[%s298 + $0x78] sm:$0xf] %v1025
        %1090 = vst [vmem:[%s298 + $0x7c] sm:$0xf] %v1026
      $region44: #{matmul_bn_act.1} parent=35 // pred_fallthru
        _
      %s1091 = smul.u32 32, %s20
      %p1092 = scmp.lt.s32.totalorder %s1091, 255
      %s1093 = scalar_select %p1092, %s1091, 255
      %p1094 = scmp.lt.s32.totalorder %s21, 0
      %s1095 = scalar_select %p1094, %s21, 0
      %s1096 = sadd.s32 %s1095, %s1093
      %s1097 = smul.addr %s1096, 4
      %s1098 = scalar_lea.vmem %s4, %s1097
      // Predicated region
      $region45: #{matmul_bn_act.1} parent=35 // pred_check
        %p1099 = pneg %p162
      $region46: #{matmul_bn_act.1} parent=35 // pred_check_branch
        %1101 = sbr.rel (%p1099) target = $region48
      $region47: #{matmul_bn_act.1} parent=35 // pred_region
        %s1102 = smul.u32 32, %s20
      $region48: #{matmul_bn_act.1} parent=35 // pred_fallthru
        _
    $region36: #{matmul_bn_act.1} parent=5 // pred_fallthru
      _
    %p1103 = scmp.le.s32.totalorder 2, %s10
    // Predicated region
    $region49: #{matmul_bn_act.1} parent=5 // pred_check
      %p1104 = pneg %p1103
    $region50: #{matmul_bn_act.1} parent=5 // pred_check_branch
      %1106 = sbr.rel (%p1104) target = $region52
    $region51: #{matmul_bn_act.1} parent=5 // pred_region
      %s1107 = ssub.s32 %s10, 2
      // Predicated region
      $region53: #{matmul_bn_act.1} parent=51 // pred_check
        %p1108 = pneg %p168
      $region54: #{matmul_bn_act.1} parent=51 // pred_check_branch
        %1110 = sbr.rel (%p1108) target = $region56
      $region55: #{matmul_bn_act.1} parent=51 // pred_region
        %s1111 = smul.u32 32, %s23
        %p1112 = scmp.lt.s32.totalorder %s1111, 255
        %s1113 = scalar_select %p1112, %s1111, 255
        %p1114 = scmp.lt.s32.totalorder %s24, 0
        %s1115 = scalar_select %p1114, %s24, 0
        %s1116 = sadd.s32 %s1115, %s1113
        %s1117 = smul.addr %s1116, 4
        %s1118 = scalar_lea.vmem %s4, %s1117
      $region56: #{matmul_bn_act.1} parent=51 // pred_fallthru
        _
    $region52: #{matmul_bn_act.1} parent=5 // pred_fallthru
      _
  $region6: #{matmul_bn_act.1} parent=0 // loop_footer
    %s14 = sadd.s32 1, %s10
  $region7: #{matmul_bn_act.1} parent=0 // loop_footer_branch
    %9 = sbr.rel target = $region3
  $region8: #{matmul_bn_act.1} parent=0 // loop_exit
    _

</llo_original>
